<compile_context>
chip_gen: v7x
topology: tpu7x:2x2x1
jax: 0.10.0
libtpu: 0.0.40
codegen_flags: <defaults>
</compile_context>

<pallas_src>
import functools

import jax
import jax.numpy as jnp
from jax.experimental import pallas as pl
from jax.experimental.pallas import tpu as pltpu


def _round_up(x, m):
    return (x + m - 1) // m * m


def _gcn_kernel(adj_ref, xw_ref, out_ref, *, d_out, compute_dtype):
    # adj_ref : (TM, N_cols)      original adj dtype (batch dim squeezed)
    # xw_ref  : (N_cols, D_cols)  compute_dtype; column `d_out` holds 1.0 for
    #                             real rows / 0.0 for padded rows, so the MXU
    #                             emits the adjacency row-sum as a free column.
    # out_ref : (TM, D_cols)      out dtype
    adj = adj_ref[...].astype(compute_dtype)   # no-op if dtypes already match
    # Single long-K MXU matmul, f32 accumulation.
    acc = jnp.dot(adj, xw_ref[...], preferred_element_type=jnp.float32)
    # denom = row-sum(adj) + 1, pulled straight out of the matmul result.
    denom = acc[:, d_out:d_out + 1] + 1.0
    # Normalize (EUP reciprocal + VPU multiply) and ReLU, in f32.
    out = jnp.maximum(acc * pl.reciprocal(denom, approx=True), 0.0)
    out_ref[...] = out.astype(out_ref.dtype)


def gcn_forward(adj, inputs, w, score_mask=None, first_layer=True, *,
                compute_dtype=jnp.bfloat16, out_dtype=jnp.float32,
                block_rows=None):
    """Pallas GCN forward.

    adj:    (B, N, N)      adjacency; kept in its original dtype in HBM
                           (pass bf16 upstream for minimum HBM traffic).
    inputs: (B, N, D_in)
    w:      (D_out, D_in)  nn.Linear weight layout (no bias).
    compute_dtype: dtype of the MXU operands (adj is cast in-kernel);
                   accumulation is always f32.
    out_dtype: dtype of the kernel output (f32 default = PyTorch parity;
               bf16 halves output HBM traffic for small D_out).
    """
    del score_mask  # accepted but unused, same as the PyTorch module
    B, N, _ = adj.shape
    D_out = w.shape[0]

    # ---- xw = inputs @ W^T + ones column (tiny, done in plain XLA) --------
    xw = jnp.einsum("bnd,od->bno", inputs.astype(jnp.float32),
                    w.astype(jnp.float32))                       # (B, N, D_out)
    ones = jnp.ones((B, N, 1), dtype=jnp.float32)
    xw1 = jnp.concatenate([xw, ones], axis=-1).astype(compute_dtype)

    n_cols = _round_up(N, 128)                 # adj lane axis / xw row axis
    d_cols = _round_up(D_out + 1, 128)         # lane-dense output (+ ones col)
    # Padded xw rows are zero -> padded adj columns contribute nothing to the
    # real output columns nor to the ones-column row-sum.
    xw_p = jnp.pad(xw1, ((0, 0), (0, n_cols - N), (0, d_cols - (D_out + 1))))

    # ---- Generation-aware tile sizing --------------------------------------
    try:
        vmem_cap = int(pltpu.get_tpu_info().vmem_capacity_bytes)
    except Exception:  # conservative fallback (v7x-sized VMEM)
        vmem_cap = 64 << 20
    if vmem_cap >= (96 << 20):        # v5e / v6e: 128 MiB physical VMEM
        adj_buf_budget = 24 << 20
        vmem_target = 100 << 20
    else:                             # v7x: 64 MiB physical VMEM per TC
        adj_buf_budget = 16 << 20
        vmem_target = 48 << 20

    adj_itemsize = jnp.dtype(adj.dtype).itemsize
    c_itemsize = jnp.dtype(compute_dtype).itemsize
    o_itemsize = jnp.dtype(out_dtype).itemsize
    cast_extra = c_itemsize if jnp.dtype(adj.dtype) != jnp.dtype(compute_dtype) else 0

    fixed = 2 * n_cols * d_cols * c_itemsize              # xw double-buffer
    per_row = (2 * n_cols * adj_itemsize                  # adj double-buffer
               + n_cols * cast_extra                      # in-kernel cast copy
               + 2 * d_cols * o_itemsize)                 # out double-buffer
    avail = max(vmem_target - fixed - (8 << 20), 2 << 20)
    tm_cap = min(adj_buf_budget // (n_cols * adj_itemsize), avail // per_row)
    if block_rows is not None:
        tm_cap = min(tm_cap, max(8, int(block_rows)))
    # Prefer full MXU row passes: multiples of 256, then 128, else 8.
    if tm_cap >= 256:
        tm = (tm_cap // 256) * 256
    elif tm_cap >= 128:
        tm = 128
    else:
        tm = max(8, (tm_cap // 8) * 8)
    n_pad8 = _round_up(N, 8)
    tm = min(tm, n_pad8)
    n_rows = _round_up(N, tm)
    # TODO(synk): for very large N also tile the K (= N_cols) axis with an
    # extra "arbitrary" grid axis + f32 accumulator scratch so tm stays large.

    # ---- Adjacency: only pad when not already tile-aligned (no cast pass) --
    if n_rows != N or n_cols != N:
        adj_in = jnp.pad(adj, ((0, 0), (0, n_rows - N), (0, n_cols - N)))
    else:
        adj_in = adj

    need = fixed + tm * per_row
    vmem_limit = int(max(min(vmem_target, need + (8 << 20)), 16 << 20))

    grid = (B, n_rows // tm)

    cost = pl.CostEstimate(
        flops=int(2 * B * n_rows * n_cols * d_cols        # adj @ [xw | 1]
                  + 3 * B * n_rows * d_cols),             # scale + relu
        transcendentals=int(B * n_rows),                   # reciprocals
        bytes_accessed=int(B * n_rows * n_cols * adj_itemsize
                           + B * n_cols * d_cols * c_itemsize
                           + B * n_rows * d_cols * o_itemsize),
    )

    kernel = functools.partial(_gcn_kernel, d_out=D_out,
                               compute_dtype=jnp.dtype(compute_dtype))

    out = pl.pallas_call(
        kernel,
        out_shape=jax.ShapeDtypeStruct((B, n_rows, d_cols), out_dtype),
        grid_spec=pltpu.PrefetchScalarGridSpec(
            num_scalar_prefetch=0,
            grid=grid,
            in_specs=[
                # one (TM, N_cols) row-tile of the adjacency per step
                pl.BlockSpec((None, tm, n_cols), lambda b, j: (b, j, 0)),
                # xw (+ ones column): full slab; block index repeats across j
                # so Pallas skips the re-DMA within a batch.
                pl.BlockSpec((None, n_cols, d_cols), lambda b, j: (b, 0, 0)),
            ],
            out_specs=pl.BlockSpec((None, tm, d_cols), lambda b, j: (b, j, 0)),
        ),
        compiler_params=pltpu.CompilerParams(
            # No cross-iteration state -> both axes are parallel (megacore can
            # shard either axis; helps B=1 / odd B on 2-core chips).
            dimension_semantics=("parallel", "parallel"),
            vmem_limit_bytes=vmem_limit,
        ),
        cost_estimate=cost,
    )(adj_in, xw_p)

    # first_layer=True -> no dropout.
    # TODO(synk): dropout path (first_layer=False, training) not implemented.
    return out[:, :N, :D_out]


def gcn_reference(adj, inputs, w):
    denom = jnp.sum(adj, axis=2, keepdims=True) + 1.0
    ax = jnp.einsum("bnm,bmd->bnd", adj, inputs)
    axw = jnp.einsum("bnd,od->bno", ax, w)
    return jnp.maximum(axw / denom, 0.0)


if __name__ == "__main__":
    key = jax.random.PRNGKey(0)
    k_adj, k_x, k_w = jax.random.split(key, 3)

    B, N, D_in, D_out = 2, 256, 32, 32

    # Synthetic non-negative adjacency (soft / normalized adjacency).
    adj = jax.random.uniform(k_adj, (B, N, N), dtype=jnp.float32)
    inputs = jax.random.normal(k_x, (B, N, D_in), dtype=jnp.float32)

    # nn.Linear(input_dim, output_dim, bias=False) weight: (D_out, D_in).
    bound = 1.0 / (D_in ** 0.5)
    w = jax.random.uniform(k_w, (D_out, D_in), dtype=jnp.float32,
                           minval=-bound, maxval=bound)

    ref = gcn_reference(adj, inputs, w)

    # f32 matmul path, multi-row-tile grid (block_rows=128 -> grid (2, 2)).
    out_f32 = jax.block_until_ready(
        gcn_forward(adj, inputs, w, compute_dtype=jnp.float32, block_rows=128))
    assert out_f32.shape == (B, N, D_out)
    assert jnp.allclose(out_f32, ref, atol=2e-3, rtol=2e-2), "f32 path mismatch"

    # Default path: f32 adj in HBM, bf16 MXU operands (cast in-kernel),
    # f32 accumulation.
    out_bf16 = jax.block_until_ready(gcn_forward(adj, inputs, w))
    assert out_bf16.shape == (B, N, D_out)
    assert jnp.allclose(out_bf16, ref, atol=2e-2, rtol=5e-2), "bf16 path mismatch"

    # bf16 adjacency upstream (minimum HBM traffic path) + bf16 output.
    out_bf16_adj = jax.block_until_ready(
        gcn_forward(adj.astype(jnp.bfloat16), inputs, w, out_dtype=jnp.bfloat16))
    assert out_bf16_adj.shape == (B, N, D_out)
    assert jnp.allclose(out_bf16_adj.astype(jnp.float32), ref,
                        atol=5e-2, rtol=1e-1), "bf16-adj path mismatch"

    # Ragged shapes (padding path): dims not multiples of 8 / 128.
    B2, N2, Din2, Dout2 = 1, 40, 24, 20
    adj2 = jax.random.uniform(k_adj, (B2, N2, N2), dtype=jnp.float32)
    x2 = jax.random.normal(k_x, (B2, N2, Din2), dtype=jnp.float32)
    w2 = jax.random.uniform(k_w, (Dout2, Din2), dtype=jnp.float32,
                            minval=-1.0, maxval=1.0)
    out2 = jax.block_until_ready(
        gcn_forward(adj2, x2, w2, compute_dtype=jnp.float32))
    assert out2.shape == (B2, N2, Dout2)
    assert jnp.allclose(out2, gcn_reference(adj2, x2, w2),
                        atol=2e-3, rtol=2e-2), "ragged path mismatch"

    print("KERNEL_OK")
</pallas_src>

<mosaic_0001>
module attributes {stable_mosaic.version = 11 : i64} {
  func.func @_gcn_kernel(%arg0: i32, %arg1: i32, %arg2: memref<1x128x256xf32, #tpu.memory_space<vmem>>, %arg3: memref<1x256x128xf32, #tpu.memory_space<vmem>>, %arg4: memref<1x128x128xf32, #tpu.memory_space<vmem>>) attributes {dimension_semantics = [#tpu.dimension_semantics<parallel>, #tpu.dimension_semantics<parallel>], iteration_bounds = array<i64: 2, 2>, scalar_prefetch = 0 : i64, scratch_operands = 0 : i64, tpu.core_type = #tpu.core_type<tc>, window_params = [{transform_indices = @transform_0, window_bounds = array<i64: 1, 128, 256>}, {transform_indices = @transform_1, window_bounds = array<i64: 1, 256, 128>}, {transform_indices = @transform_2, window_bounds = array<i64: 1, 128, 128>}]} {
    %c0 = arith.constant 0 : index
    %c0_0 = arith.constant 0 : index
    %c0_1 = arith.constant 0 : index
    %0 = vector.load %arg2[%c0, %c0_0, %c0_1] : memref<1x128x256xf32, #tpu.memory_space<vmem>>, vector<1x128x256xf32>
    %1 = vector.shape_cast %0 : vector<1x128x256xf32> to vector<128x256xf32>
    %c0_2 = arith.constant 0 : index
    %c0_3 = arith.constant 0 : index
    %c0_4 = arith.constant 0 : index
    %2 = vector.load %arg3[%c0_2, %c0_3, %c0_4] : memref<1x256x128xf32, #tpu.memory_space<vmem>>, vector<1x256x128xf32>
    %3 = vector.shape_cast %2 : vector<1x256x128xf32> to vector<256x128xf32>
    %cst = arith.constant dense<0.000000e+00> : vector<128x128xf32>
    %4 = tpu.matmul %1, %3, %cst {dimension_numbers = #tpu.dot_dimension_numbers<[1], [0], [0], [1], [0, 0, 1, 1], [], []>} : vector<128x256xf32>, vector<256x128xf32>, vector<128x128xf32> -> vector<128x128xf32>
    %5 = vector.extract_strided_slice %4 {offsets = [0, 32], sizes = [128, 1], strides = [1, 1]} : vector<128x128xf32> to vector<128x1xf32>
    %cst_5 = arith.constant 1.000000e+00 : f32
    %6 = vector.broadcast %cst_5 : f32 to vector<128x1xf32>
    %7 = arith.addf %5, %6 : vector<128x1xf32>
    %8 = tpu.reciprocal %7 {approx = true} : vector<128x1xf32> -> vector<128x1xf32>
    %9 = vector.broadcast %8 : vector<128x1xf32> to vector<128x128xf32>
    %10 = arith.mulf %4, %9 : vector<128x128xf32>
    %cst_6 = arith.constant 0.000000e+00 : f32
    %11 = vector.broadcast %cst_6 : f32 to vector<128x128xf32>
    %12 = arith.maximumf %10, %11 : vector<128x128xf32>
    %c0_7 = arith.constant 0 : index
    %c0_8 = arith.constant 0 : index
    %c0_9 = arith.constant 0 : index
    %13 = vector.load %arg4[%c0_7, %c0_8, %c0_9] : memref<1x128x128xf32, #tpu.memory_space<vmem>>, vector<1x128x128xf32>
    %14 = vector.shape_cast %13 : vector<1x128x128xf32> to vector<128x128xf32>
    %15 = vector.shape_cast %12 : vector<128x128xf32> to vector<1x128x128xf32>
    tpu.vector_store %arg4[%c0_7, %c0_8, %c0_9], %15 {strides = array<i32>} : memref<1x128x128xf32, #tpu.memory_space<vmem>>, vector<1x128x128xf32>,
    return
  }
  func.func @transform_0(%arg0: i32, %arg1: i32) -> (i32, i32, i32) {
    %c0_i32 = arith.constant 0 : i32
    %c0_i32_0 = arith.constant 0 : i32
    return %arg0, %arg1, %c0_i32 : i32, i32, i32
  }
  func.func @transform_1(%arg0: i32, %arg1: i32) -> (i32, i32, i32) {
    %c0_i32 = arith.constant 0 : i32
    %c0_i32_0 = arith.constant 0 : i32
    %c0_i32_1 = arith.constant 0 : i32
    return %arg0, %c0_i32, %c0_i32_0 : i32, i32, i32
  }
  func.func @transform_2(%arg0: i32, %arg1: i32) -> (i32, i32, i32) {
    %c0_i32 = arith.constant 0 : i32
    %c0_i32_0 = arith.constant 0 : i32
    return %arg0, %arg1, %c0_i32 : i32, i32, i32
  }
}

</mosaic_0001>

<llo_original>
// kernel: tpu_custom_call.1
$region0: #{tpu_custom_call.1}
  #allocation0 [shape = 'u32[]', space=smem, size = 0x4, offset = 0x4, fixed_abs, tag = 'smem constant byte address 0x4 - core index']
  #allocation1 [shape = 'u32[144,128]{1,0:T(1,128)}', space=vmem, size = 0x12000, scoped, tag = 'internal scratch']
  %s0 = inlined_call_operand.hbm [shape: f32[2,256,256], index: 0, kind: input, shape index: {}]
  %s1 = inlined_call_operand.hbm [shape: f32[2,256,128], index: 1, kind: input, shape index: {}]
  %s2 = inlined_call_operand.hbm [shape: f32[2,256,128], index: 2, kind: output, shape index: {}]
  %s3 = sld [smem:[#allocation0]]
  $region49: #{tpu_custom_call.1} parent=0
    _
  %s5 = ssub.s32 1, %s3
  %s6 = scalar_select 0, %s5, %s3
  $region1: #{tpu_custom_call.1} parent=0
    #allocation2 [shape = 'u8[262144]{0}', space=vmem, size = 0x40000, scoped, tag = 'input window, operand 0']
    #allocation3 [shape = 's32[2]{0}', space=sflag, size = 0x8, scoped, tag = 'scoped memory for tpu_custom_call.1']
    #allocation4 [shape = 's32[2]{0}', space=sflag, size = 0x8, scoped, tag = 'scoped memory for tpu_custom_call.1']
    #allocation5 [shape = 'u8[262144]{0}', space=vmem, size = 0x40000, scoped, tag = 'input window, operand 1']
    #allocation6 [shape = 's32[2]{0}', space=sflag, size = 0x8, scoped, tag = 'scoped memory for tpu_custom_call.1']
    #allocation7 [shape = 'u8[131072]{0}', space=vmem, size = 0x20000, scoped, tag = 'output window, operand 0']
    %7 = vsyncpa [#allocation3], 0
    %s8 = scalar_lea.sflag [#allocation3], 1
    %9 = vsyncpa %s8, 0
    %10 = vsyncpa [#allocation6], 0
    %s11 = scalar_lea.sflag [#allocation6], 1
    %12 = vsyncpa %s11, 0
    %13 = vsyncpa [#allocation4], 0
    %s14 = scalar_lea.sflag [#allocation4], 1
    %15 = vsyncpa %s14, 0
    loop: start=0, step=1, limit=6
    $region2: #{tpu_custom_call.1} parent=1 // loop_pre_header
      _
    $region3: #{tpu_custom_call.1} parent=1 // loop_header
      %s17 = sphi 0, %s21
      %p18 = scmp.ge.s32.totalorder %s17, 6
      %s24 = sphi 0, %s36
      %s25 = sphi 0, %s32
      %s26 = sphi 0, %s24
      %s27 = sphi 0, %s25
      %s28 = sphi 0, %s26
      %s29 = sphi 0, %s27
      %s41 = sphi 0, %s43
      %s44 = sphi 0, %s41
      %s45 = sphi 0, %s44
      %s61 = sphi 0, %s45
      %s67 = sphi 0, %s69
      %s70 = sphi 0, %s67
      %s71 = sphi 0, %s70
      %s87 = sphi 0, %s71
      %s95 = sphi 0, %s97
      %s98 = sphi 0, %s95
      %s99 = sphi 0, %s98
      %s115 = sphi 0, %s99
    $region4: #{tpu_custom_call.1} parent=1 // loop_header_branch
      %20 = sbr.rel (%p18) target = $region8
    $region5: #{tpu_custom_call.1} parent=1 // loop_body
      %s22 = ssub.s32 %s17, 1
      %s23 = ssub.s32 %s17, 2
      %s30 = sadd.s32 1, %s25
      %p31 = scmp.ge.s32.totalorder %s30, 2
      %s32 = scalar_select %p31, 0, %s30
      %s33 = sadd.s32 1, %s24
      %s34 = scalar_select %p31, %s33, %s24
      %p35 = scmp.ge.s32.totalorder %s34, 2
      %s36 = scalar_select %p35, 0, %s34
      %s37 = ssub.s32 %s24, %s36
      %s38 = ssub.s32 %s25, %s32
      %s39 = sor.u32 %s37, %s38
      %p40 = scmp.eq.s32.totalorder %s39, 0
      %s42 = sadd.s32 %s41, 1
      %s43 = scalar_select %p40, %s41, %s42
      %p46 = pneg %p40
      %p47 = scmp.eq.s32.totalorder %s17, 3
      %p48 = por %p46, %p47
      %p49 = scmp.ne.s32.totalorder %s41, %s44
      %p50 = scmp.eq.s32.totalorder %s17, 0
      %p51 = por %p49, %p50
      %p52 = scmp.ne.s32.totalorder %s41, %s44
      %p53 = scmp.eq.s32.totalorder %s22, 3
      %p54 = por %p52, %p53
      %p55 = scmp.ne.s32.totalorder %s44, %s45
      %p56 = scmp.eq.s32.totalorder %s22, 0
      %p57 = por %p55, %p56
      %p58 = scmp.ne.s32.totalorder %s44, %s45
      %p59 = scmp.eq.s32.totalorder %s23, 3
      %p60 = por %p58, %p59
      %p62 = scmp.ne.s32.totalorder %s45, %s61
      %p63 = scmp.eq.s32.totalorder %s23, 0
      %p64 = por %p62, %p63
      %s65 = ssub.s32 %s24, %s36
      %p66 = scmp.eq.s32.totalorder %s65, 0
      %s68 = sadd.s32 %s67, 1
      %s69 = scalar_select %p66, %s67, %s68
      %p72 = pneg %p66
      %p73 = scmp.eq.s32.totalorder %s17, 3
      %p74 = por %p72, %p73
      %p75 = scmp.ne.s32.totalorder %s67, %s70
      %p76 = scmp.eq.s32.totalorder %s17, 0
      %p77 = por %p75, %p76
      %p78 = scmp.ne.s32.totalorder %s67, %s70
      %p79 = scmp.eq.s32.totalorder %s22, 3
      %p80 = por %p78, %p79
      %p81 = scmp.ne.s32.totalorder %s70, %s71
      %p82 = scmp.eq.s32.totalorder %s22, 0
      %p83 = por %p81, %p82
      %p84 = scmp.ne.s32.totalorder %s70, %s71
      %p85 = scmp.eq.s32.totalorder %s23, 3
      %p86 = por %p84, %p85
      %p88 = scmp.ne.s32.totalorder %s71, %s87
      %p89 = scmp.eq.s32.totalorder %s23, 0
      %p90 = por %p88, %p89
      %s91 = ssub.s32 %s24, %s36
      %s92 = ssub.s32 %s25, %s32
      %s93 = sor.u32 %s91, %s92
      %p94 = scmp.eq.s32.totalorder %s93, 0
      %s96 = sadd.s32 %s95, 1
      %s97 = scalar_select %p94, %s95, %s96
      %p100 = pneg %p94
      %p101 = scmp.eq.s32.totalorder %s17, 3
      %p102 = por %p100, %p101
      %p103 = scmp.ne.s32.totalorder %s95, %s98
      %p104 = scmp.eq.s32.totalorder %s17, 0
      %p105 = por %p103, %p104
      %p106 = scmp.ne.s32.totalorder %s95, %s98
      %p107 = scmp.eq.s32.totalorder %s22, 3
      %p108 = por %p106, %p107
      %p109 = scmp.ne.s32.totalorder %s98, %s99
      %p110 = scmp.eq.s32.totalorder %s22, 0
      %p111 = por %p109, %p110
      %p112 = scmp.ne.s32.totalorder %s98, %s99
      %p113 = scmp.eq.s32.totalorder %s23, 3
      %p114 = por %p112, %p113
      %p116 = scmp.ne.s32.totalorder %s99, %s115
      %p117 = scmp.eq.s32.totalorder %s23, 0
      %p118 = por %p116, %p117
      %p119 = scmp.le.s32.totalorder 1, %s17
      %p120 = scmp.lt.s32.totalorder %s17, 5
      %p121 = pnand %p119, %p120
      %p122 = pneg %p121
      // Predicated region
      $region9: #{tpu_custom_call.1} parent=5 // pred_check
        _
      $region10: #{tpu_custom_call.1} parent=5 // pred_check_branch
        %124 = sbr.rel (%p121) target = $region12
      $region11: #{tpu_custom_call.1} parent=5 // pred_region
        %s125 = ssub.s32 %s17, 1
      $region12: #{tpu_custom_call.1} parent=5 // pred_fallthru
        _
      %p126 = scmp.lt.s32.totalorder %s17, 4
      // Predicated region
      $region13: #{tpu_custom_call.1} parent=5 // pred_check
        %p127 = pneg %p126
      $region14: #{tpu_custom_call.1} parent=5 // pred_check_branch
        %129 = sbr.rel (%p127) target = $region16
      $region15: #{tpu_custom_call.1} parent=5 // pred_region
        // Predicated region
        $region17: #{tpu_custom_call.1} parent=15 // pred_check
          %p130 = pneg %p51
        $region18: #{tpu_custom_call.1} parent=15 // pred_check_branch
          %132 = sbr.rel (%p130) target = $region20
        $region19: #{tpu_custom_call.1} parent=15 // pred_region
          %s133 = sand.u32 %s41, 1
          %s134 = scalar_lea.sflag [#allocation3], %s133
          %s135 = sand.u32 %s41, 1
          %s136 = smul.addr %s135, 256
          %s137 = scalar_lea.vmem [#allocation2], %s136
          %s138 = smul.u32 16, %s25
          %s140 = ssub.s32 4096, 4096
          %141 = vsyncadd %s134, %s140
          %s142 = smul.addr %s138, 2
          %s143 = smul.addr %s24, 64
          %s144 = sadd.s32 %s142, %s143
          %s145 = smul.addr %s144, 128
          %s146 = scalar_lea.hbm %s0, %s145
          %s147 = sshll.u32 %s137, 4
          %s148 = int_to_ptr.vmem [resolvable:$true] %s147
          %153 = dma.hbm_to_vmem [thread:$0]  %s146, 4096, %s148, %s134, 256, 256, 16
        $region20: #{tpu_custom_call.1} parent=15 // pred_fallthru
          _
        // Predicated region
        $region21: #{tpu_custom_call.1} parent=15 // pred_check
          %p154 = pneg %p77
        $region22: #{tpu_custom_call.1} parent=15 // pred_check_branch
          %156 = sbr.rel (%p154) target = $region24
        $region23: #{tpu_custom_call.1} parent=15 // pred_region
          %s157 = sand.u32 %s67, 1
          %s158 = scalar_lea.sflag [#allocation6], %s157
          %s159 = sand.u32 %s67, 1
          %s160 = smul.addr %s159, 256
          %s161 = scalar_lea.vmem [#allocation5], %s160
          %s163 = ssub.s32 4096, 4096
          %164 = vsyncadd %s158, %s163
          %s165 = smul.addr %s24, 32
          %s166 = smul.addr %s165, 128
          %s167 = scalar_lea.hbm %s1, %s166
          %s168 = sshll.u32 %s161, 4
          %s169 = int_to_ptr.vmem [resolvable:$true] %s168
          %174 = dma.hbm_to_vmem [thread:$0]  %s167, 4096, %s169, %s158, 128, 128, 8
        $region24: #{tpu_custom_call.1} parent=15 // pred_fallthru
          _
      $region16: #{tpu_custom_call.1} parent=5 // pred_fallthru
        _
      %p175 = scmp.le.s32.totalorder 1, %s17
      %p176 = scmp.lt.s32.totalorder %s17, 5
      %p177 = pnand %p175, %p176
      %p178 = pneg %p177
      // Predicated region
      $region25: #{tpu_custom_call.1} parent=5 // pred_check
        _
      $region26: #{tpu_custom_call.1} parent=5 // pred_check_branch
        %180 = sbr.rel (%p177) target = $region28
      $region27: #{tpu_custom_call.1} parent=5 // pred_region
        %s181 = ssub.s32 %s17, 1
        %s182 = sand.u32 %s44, 1
        %s183 = scalar_lea.sflag [#allocation3], %s182
        %s184 = sand.u32 %s44, 1
        %s185 = smul.addr %s184, 256
        %s186 = scalar_lea.vmem [#allocation2], %s185
        // Predicated region
        $region29: #{tpu_custom_call.1} parent=27 // pred_check
          %p187 = pneg %p57
        $region30: #{tpu_custom_call.1} parent=27 // pred_check_branch
          %189 = sbr.rel (%p187) target = $region32
        $region31: #{tpu_custom_call.1} parent=27 // pred_region
          %190 = dma.done %s183, 4096
        $region32: #{tpu_custom_call.1} parent=27 // pred_fallthru
          _
        %s191 = sand.u32 %s70, 1
        %s192 = scalar_lea.sflag [#allocation6], %s191
        %s193 = sand.u32 %s70, 1
        %s194 = smul.addr %s193, 256
        %s195 = scalar_lea.vmem [#allocation5], %s194
        // Predicated region
        $region33: #{tpu_custom_call.1} parent=27 // pred_check
          %p196 = pneg %p83
        $region34: #{tpu_custom_call.1} parent=27 // pred_check_branch
          %198 = sbr.rel (%p196) target = $region36
        $region35: #{tpu_custom_call.1} parent=27 // pred_region
          %199 = dma.done %s192, 4096
        $region36: #{tpu_custom_call.1} parent=27 // pred_fallthru
          _
        %s200 = sand.u32 %s44, 1
        %s201 = scalar_lea.sflag [#allocation3], %s200
        %s202 = sand.u32 %s44, 1
        %s203 = smul.addr %s202, 256
        %s204 = scalar_lea.vmem [#allocation2], %s203
        %p205 = pneg %p57
        %p206 = pneg %p54
        %s207 = sand.u32 %s70, 1
        %s208 = scalar_lea.sflag [#allocation6], %s207
        %s209 = sand.u32 %s70, 1
        %s210 = smul.addr %s209, 256
        %s211 = scalar_lea.vmem [#allocation5], %s210
        %p212 = pneg %p83
        %p213 = pneg %p80
        %p214 = pneg %p111
        %p215 = pneg %p108
        %s216 = sand.u32 %s98, 1
        %s217 = scalar_lea.sflag [#allocation4], %s216
        %s218 = sand.u32 %s98, 1
        %s219 = smul.addr %s218, 128
        %s220 = scalar_lea.vmem [#allocation7], %s219
        %s221 = smul.u32 16, %s27
        %s222 = smul.u32 16, %s27
        %v223 = vld [vmem:[%s186] sm:$0xff]
        %v224 = vld [vmem:[%s186 + $0x8] sm:$0xff]
        %v225 = vld [vmem:[%s186 + $0x10] sm:$0xff]
        %v226 = vld [vmem:[%s186 + $0x18] sm:$0xff]
        %v227 = vld [vmem:[%s186 + $0x20] sm:$0xff]
        %v228 = vld [vmem:[%s186 + $0x28] sm:$0xff]
        %v229 = vld [vmem:[%s186 + $0x30] sm:$0xff]
        %v230 = vld [vmem:[%s186 + $0x38] sm:$0xff]
        %v231 = vld [vmem:[%s186 + $0x40] sm:$0xff]
        %v232 = vld [vmem:[%s186 + $0x48] sm:$0xff]
        %v233 = vld [vmem:[%s186 + $0x50] sm:$0xff]
        %v234 = vld [vmem:[%s186 + $0x58] sm:$0xff]
        %v235 = vld [vmem:[%s186 + $0x60] sm:$0xff]
        %v236 = vld [vmem:[%s186 + $0x68] sm:$0xff]
        %v237 = vld [vmem:[%s186 + $0x70] sm:$0xff]
        %v238 = vld [vmem:[%s186 + $0x78] sm:$0xff]
        %v239 = vld [vmem:[%s186 + $0x80] sm:$0xff]
        %v240 = vld [vmem:[%s186 + $0x88] sm:$0xff]
        %v241 = vld [vmem:[%s186 + $0x90] sm:$0xff]
        %v242 = vld [vmem:[%s186 + $0x98] sm:$0xff]
        %v243 = vld [vmem:[%s186 + $0xa0] sm:$0xff]
        %v244 = vld [vmem:[%s186 + $0xa8] sm:$0xff]
        %v245 = vld [vmem:[%s186 + $0xb0] sm:$0xff]
        %v246 = vld [vmem:[%s186 + $0xb8] sm:$0xff]
        %v247 = vld [vmem:[%s186 + $0xc0] sm:$0xff]
        %v248 = vld [vmem:[%s186 + $0xc8] sm:$0xff]
        %v249 = vld [vmem:[%s186 + $0xd0] sm:$0xff]
        %v250 = vld [vmem:[%s186 + $0xd8] sm:$0xff]
        %v251 = vld [vmem:[%s186 + $0xe0] sm:$0xff]
        %v252 = vld [vmem:[%s186 + $0xe8] sm:$0xff]
        %v253 = vld [vmem:[%s186 + $0xf0] sm:$0xff]
        %v254 = vld [vmem:[%s186 + $0xf8] sm:$0xff]
        %v255 = vld [vmem:[%s195] sm:$0xff]
        %v256 = vld [vmem:[%s195 + $0x8] sm:$0xff]
        %v257 = vld [vmem:[%s195 + $0x10] sm:$0xff]
        %v258 = vld [vmem:[%s195 + $0x18] sm:$0xff]
        %v259 = vld [vmem:[%s195 + $0x20] sm:$0xff]
        %v260 = vld [vmem:[%s195 + $0x28] sm:$0xff]
        %v261 = vld [vmem:[%s195 + $0x30] sm:$0xff]
        %v262 = vld [vmem:[%s195 + $0x38] sm:$0xff]
        %v263 = vld [vmem:[%s195 + $0x40] sm:$0xff]
        %v264 = vld [vmem:[%s195 + $0x48] sm:$0xff]
        %v265 = vld [vmem:[%s195 + $0x50] sm:$0xff]
        %v266 = vld [vmem:[%s195 + $0x58] sm:$0xff]
        %v267 = vld [vmem:[%s195 + $0x60] sm:$0xff]
        %v268 = vld [vmem:[%s195 + $0x68] sm:$0xff]
        %v269 = vld [vmem:[%s195 + $0x70] sm:$0xff]
        %v270 = vld [vmem:[%s195 + $0x78] sm:$0xff]
        %v271 = vld [vmem:[%s195 + $0x80] sm:$0xff]
        %v272 = vld [vmem:[%s195 + $0x88] sm:$0xff]
        %v273 = vld [vmem:[%s195 + $0x90] sm:$0xff]
        %v274 = vld [vmem:[%s195 + $0x98] sm:$0xff]
        %v275 = vld [vmem:[%s195 + $0xa0] sm:$0xff]
        %v276 = vld [vmem:[%s195 + $0xa8] sm:$0xff]
        %v277 = vld [vmem:[%s195 + $0xb0] sm:$0xff]
        %v278 = vld [vmem:[%s195 + $0xb8] sm:$0xff]
        %v279 = vld [vmem:[%s195 + $0xc0] sm:$0xff]
        %v280 = vld [vmem:[%s195 + $0xc8] sm:$0xff]
        %v281 = vld [vmem:[%s195 + $0xd0] sm:$0xff]
        %v282 = vld [vmem:[%s195 + $0xd8] sm:$0xff]
        %v283 = vld [vmem:[%s195 + $0xe0] sm:$0xff]
        %v284 = vld [vmem:[%s195 + $0xe8] sm:$0xff]
        %v285 = vld [vmem:[%s195 + $0xf0] sm:$0xff]
        %v286 = vld [vmem:[%s195 + $0xf8] sm:$0xff]
        %287 = vmatprep.subr.mxu0 0.0
        %288 = vmatpush1.msra.mxu0 %v255
        %289 = vmatprep.subr.mxu0 0.0
        %290 = vmatpush1.msra.mxu0 %v256
        %291 = vmatprep.subr.mxu0 0.0
        %292 = vmatpush1.msra.mxu0 %v257
        %293 = vmatprep.subr.mxu0 0.0
        %294 = vmatpush1.msra.mxu0 %v258
        %295 = vmatprep.subr.mxu0 0.0
        %296 = vmatpush1.msra.mxu0 %v259
        %297 = vmatprep.subr.mxu0 0.0
        %298 = vmatpush1.msra.mxu0 %v260
        %299 = vmatprep.subr.mxu0 0.0
        %300 = vmatpush1.msra.mxu0 %v261
        %301 = vmatprep.subr.mxu0 0.0
        %302 = vmatpush1.msra.mxu0 %v262
        %303 = vmatprep.subr.mxu0 0.0
        %304 = vmatpush1.msra.mxu0 %v263
        %305 = vmatprep.subr.mxu0 0.0
        %306 = vmatpush1.msra.mxu0 %v264
        %307 = vmatprep.subr.mxu0 0.0
        %308 = vmatpush1.msra.mxu0 %v265
        %309 = vmatprep.subr.mxu0 0.0
        %310 = vmatpush1.msra.mxu0 %v266
        %311 = vmatprep.subr.mxu0 0.0
        %312 = vmatpush1.msra.mxu0 %v267
        %313 = vmatprep.subr.mxu0 0.0
        %314 = vmatpush1.msra.mxu0 %v268
        %315 = vmatprep.subr.mxu0 0.0
        %316 = vmatpush1.msra.mxu0 %v269
        %317 = vmatprep.subr.mxu0 0.0
        %318 = vmatpush1.msra.mxu0 %v270
        %319 = vmatprep.subr.mxu0 0.0
        %320 = vmatpush1.msra.mxu0 %v271
        %321 = vmatprep.subr.mxu0 0.0
        %322 = vmatpush1.msra.mxu0 %v272
        %323 = vmatprep.subr.mxu0 0.0
        %324 = vmatpush1.msra.mxu0 %v273
        %325 = vmatprep.subr.mxu0 0.0
        %326 = vmatpush1.msra.mxu0 %v274
        %327 = vmatprep.subr.mxu0 0.0
        %328 = vmatpush1.msra.mxu0 %v275
        %329 = vmatprep.subr.mxu0 0.0
        %330 = vmatpush1.msra.mxu0 %v276
        %331 = vmatprep.subr.mxu0 0.0
        %332 = vmatpush1.msra.mxu0 %v277
        %333 = vmatprep.subr.mxu0 0.0
        %334 = vmatpush1.msra.mxu0 %v278
        %335 = vmatprep.subr.mxu0 0.0
        %336 = vmatpush1.msra.mxu0 %v279
        %337 = vmatprep.subr.mxu0 0.0
        %338 = vmatpush1.msra.mxu0 %v280
        %339 = vmatprep.subr.mxu0 0.0
        %340 = vmatpush1.msra.mxu0 %v281
        %341 = vmatprep.subr.mxu0 0.0
        %342 = vmatpush1.msra.mxu0 %v282
        %343 = vmatprep.subr.mxu0 0.0
        %344 = vmatpush1.msra.mxu0 %v283
        %345 = vmatprep.subr.mxu0 0.0
        %346 = vmatpush1.msra.mxu0 %v284
        %347 = vmatprep.subr.mxu0 0.0
        %348 = vmatpush1.msra.mxu0 %v285
        %349 = vmatprep.subr.mxu0 0.0
        %350 = vmatpush1.msra.mxu0 %v286
        %351 = vmatprep.mubr.f32.mxu0 %v224
        %352 = vmatmul.mubr.f32.gmra.mrb[0].mxu0 %v223
        %v353 = vpop.f32.mrb[0].mxu0
        %v354 = vadd.f32 0.0, %v353
        %v355 = vpop.f32.mrb[0].mxu0
        %356 = vmatprep.mubr.f32.mxu0 %v226
        %357 = vmatmul.mubr.f32.gmra.mrb[0].mxu0 %v225
        %v358 = vpop.f32.mrb[0].mxu0
        %v359 = vadd.f32 0.0, %v358
        %v360 = vpop.f32.mrb[0].mxu0
        %361 = vmatprep.mubr.f32.mxu0 %v228
        %362 = vmatmul.mubr.f32.gmra.mrb[0].mxu0 %v227
        %v363 = vpop.f32.mrb[0].mxu0
        %v364 = vadd.f32 0.0, %v363
        %v365 = vpop.f32.mrb[0].mxu0
        %366 = vmatprep.mubr.f32.mxu0 %v230
        %367 = vmatmul.mubr.f32.gmra.mrb[0].mxu0 %v229
        %v368 = vpop.f32.mrb[0].mxu0
        %v369 = vadd.f32 0.0, %v368
        %v370 = vpop.f32.mrb[0].mxu0
        %371 = vmatprep.mubr.f32.mxu0 %v232
        %372 = vmatmul.mubr.f32.gmra.mrb[0].mxu0 %v231
        %v373 = vpop.f32.mrb[0].mxu0
        %v374 = vadd.f32 0.0, %v373
        %v375 = vpop.f32.mrb[0].mxu0
        %376 = vmatprep.mubr.f32.mxu0 %v234
        %377 = vmatmul.mubr.f32.gmra.mrb[0].mxu0 %v233
        %v378 = vpop.f32.mrb[0].mxu0
        %v379 = vadd.f32 0.0, %v378
        %v380 = vpop.f32.mrb[0].mxu0
        %381 = vmatprep.mubr.f32.mxu0 %v236
        %382 = vmatmul.mubr.f32.gmra.mrb[0].mxu0 %v235
        %v383 = vpop.f32.mrb[0].mxu0
        %v384 = vadd.f32 0.0, %v383
        %v385 = vpop.f32.mrb[0].mxu0
        %386 = vmatprep.mubr.f32.mxu0 %v238
        %387 = vmatmul.mubr.f32.gmra.mrb[0].mxu0 %v237
        %v388 = vpop.f32.mrb[0].mxu0
        %v389 = vadd.f32 0.0, %v388
        %v390 = vpop.f32.mrb[0].mxu0
        %391 = vmatprep.mubr.f32.mxu0 %v240
        %392 = vmatmul.mubr.f32.gmra.mrb[0].mxu0 %v239
        %v393 = vpop.f32.mrb[0].mxu0
        %v394 = vadd.f32 0.0, %v393
        %v395 = vpop.f32.mrb[0].mxu0
        %396 = vmatprep.mubr.f32.mxu0 %v242
        %397 = vmatmul.mubr.f32.gmra.mrb[0].mxu0 %v241
        %v398 = vpop.f32.mrb[0].mxu0
        %v399 = vadd.f32 0.0, %v398
        %v400 = vpop.f32.mrb[0].mxu0
        %401 = vmatprep.mubr.f32.mxu0 %v244
        %402 = vmatmul.mubr.f32.gmra.mrb[0].mxu0 %v243
        %v403 = vpop.f32.mrb[0].mxu0
        %v404 = vadd.f32 0.0, %v403
        %v405 = vpop.f32.mrb[0].mxu0
        %406 = vmatprep.mubr.f32.mxu0 %v246
        %407 = vmatmul.mubr.f32.gmra.mrb[0].mxu0 %v245
        %v408 = vpop.f32.mrb[0].mxu0
        %v409 = vadd.f32 0.0, %v408
        %v410 = vpop.f32.mrb[0].mxu0
        %411 = vmatprep.mubr.f32.mxu0 %v248
        %412 = vmatmul.mubr.f32.gmra.mrb[0].mxu0 %v247
        %v413 = vpop.f32.mrb[0].mxu0
        %v414 = vadd.f32 0.0, %v413
        %v415 = vpop.f32.mrb[0].mxu0
        %416 = vmatprep.mubr.f32.mxu0 %v250
        %417 = vmatmul.mubr.f32.gmra.mrb[0].mxu0 %v249
        %v418 = vpop.f32.mrb[0].mxu0
        %v419 = vadd.f32 0.0, %v418
        %v420 = vpop.f32.mrb[0].mxu0
        %421 = vmatprep.mubr.f32.mxu0 %v252
        %422 = vmatmul.mubr.f32.gmra.mrb[0].mxu0 %v251
        %v423 = vpop.f32.mrb[0].mxu0
        %v424 = vadd.f32 0.0, %v423
        %v425 = vpop.f32.mrb[0].mxu0
        %426 = vmatprep.mubr.f32.mxu0 %v254
        %427 = vmatmul.mubr.f32.gmra.mrb[0].mxu0 %v253
        %v428 = vpop.f32.mrb[0].mxu0
        %v429 = vadd.f32 0.0, %v428
        %v430 = vpop.f32.mrb[0].mxu0
        %431 = vdwg.mxu0
        %v432 = vadd.f32 %v354, 1.0
        %v433 = vadd.f32 %v359, 1.0
        %v434 = vadd.f32 %v364, 1.0
        %v435 = vadd.f32 %v369, 1.0
        %v436 = vadd.f32 %v374, 1.0
        %v437 = vadd.f32 %v379, 1.0
        %v438 = vadd.f32 %v384, 1.0
        %v439 = vadd.f32 %v389, 1.0
        %v440 = vadd.f32 %v394, 1.0
        %v441 = vadd.f32 %v399, 1.0
        %v442 = vadd.f32 %v404, 1.0
        %v443 = vadd.f32 %v409, 1.0
        %v444 = vadd.f32 %v414, 1.0
        %v445 = vadd.f32 %v419, 1.0
        %v446 = vadd.f32 %v424, 1.0
        %v447 = vadd.f32 %v429, 1.0
        %v448 = vrcp.pop %v432
        %v449 = vrcp.pop %v433
        %v450 = vrcp.pop %v434
        %v451 = vrcp.pop %v435
        %v452 = vrcp.pop %v436
        %v453 = vrcp.pop %v437
        %v454 = vrcp.pop %v438
        %v455 = vrcp.pop %v439
        %v456 = vrcp.pop %v440
        %v457 = vrcp.pop %v441
        %v458 = vrcp.pop %v442
        %v459 = vrcp.pop %v443
        %v460 = vrcp.pop %v444
        %v461 = vrcp.pop %v445
        %v462 = vrcp.pop %v446
        %v463 = vrcp.pop %v447
        %465 = vset.pattern.permute.xlu0 32
        %466 = vperm.xlu0 %465, %v448
        %v467 = vpop.permute.xlu0 %466
        %470 = vset.pattern.permute.xlu0 32
        %471 = vperm.xlu0 %470, %v449
        %v472 = vpop.permute.xlu0 %471
        %475 = vset.pattern.permute.xlu0 32
        %476 = vperm.xlu0 %475, %v450
        %v477 = vpop.permute.xlu0 %476
        %480 = vset.pattern.permute.xlu0 32
        %481 = vperm.xlu0 %480, %v451
        %v482 = vpop.permute.xlu0 %481
        %485 = vset.pattern.permute.xlu0 32
        %486 = vperm.xlu0 %485, %v452
        %v487 = vpop.permute.xlu0 %486
        %490 = vset.pattern.permute.xlu0 32
        %491 = vperm.xlu0 %490, %v453
        %v492 = vpop.permute.xlu0 %491
        %495 = vset.pattern.permute.xlu0 32
        %496 = vperm.xlu0 %495, %v454
        %v497 = vpop.permute.xlu0 %496
        %500 = vset.pattern.permute.xlu0 32
        %501 = vperm.xlu0 %500, %v455
        %v502 = vpop.permute.xlu0 %501
        %505 = vset.pattern.permute.xlu0 32
        %506 = vperm.xlu0 %505, %v456
        %v507 = vpop.permute.xlu0 %506
        %510 = vset.pattern.permute.xlu0 32
        %511 = vperm.xlu0 %510, %v457
        %v512 = vpop.permute.xlu0 %511
        %515 = vset.pattern.permute.xlu0 32
        %516 = vperm.xlu0 %515, %v458
        %v517 = vpop.permute.xlu0 %516
        %520 = vset.pattern.permute.xlu0 32
        %521 = vperm.xlu0 %520, %v459
        %v522 = vpop.permute.xlu0 %521
        %525 = vset.pattern.permute.xlu0 32
        %526 = vperm.xlu0 %525, %v460
        %v527 = vpop.permute.xlu0 %526
        %530 = vset.pattern.permute.xlu0 32
        %531 = vperm.xlu0 %530, %v461
        %v532 = vpop.permute.xlu0 %531
        %535 = vset.pattern.permute.xlu0 32
        %536 = vperm.xlu0 %535, %v462
        %v537 = vpop.permute.xlu0 %536
        %540 = vset.pattern.permute.xlu0 32
        %541 = vperm.xlu0 %540, %v463
        %v542 = vpop.permute.xlu0 %541
        %v544 = vmul.f32 %v354, %v467
        %v545 = vmul.f32 %v359, %v472
        %v546 = vmul.f32 %v364, %v477
        %v547 = vmul.f32 %v369, %v482
        %v548 = vmul.f32 %v374, %v487
        %v549 = vmul.f32 %v379, %v492
        %v550 = vmul.f32 %v384, %v497
        %v551 = vmul.f32 %v389, %v502
        %v552 = vmul.f32 %v394, %v507
        %v553 = vmul.f32 %v399, %v512
        %v554 = vmul.f32 %v404, %v517
        %v555 = vmul.f32 %v409, %v522
        %v556 = vmul.f32 %v414, %v527
        %v557 = vmul.f32 %v419, %v532
        %v558 = vmul.f32 %v424, %v537
        %v559 = vmul.f32 %v429, %v542
        %v560 = vmax.f32 %v544, 0.0
        %v561 = vmax.f32 %v545, 0.0
        %v562 = vmax.f32 %v546, 0.0
        %v563 = vmax.f32 %v547, 0.0
        %v564 = vmax.f32 %v548, 0.0
        %v565 = vmax.f32 %v549, 0.0
        %v566 = vmax.f32 %v550, 0.0
        %v567 = vmax.f32 %v551, 0.0
        %v568 = vmax.f32 %v552, 0.0
        %v569 = vmax.f32 %v553, 0.0
        %v570 = vmax.f32 %v554, 0.0
        %v571 = vmax.f32 %v555, 0.0
        %v572 = vmax.f32 %v556, 0.0
        %v573 = vmax.f32 %v557, 0.0
        %v574 = vmax.f32 %v558, 0.0
        %v575 = vmax.f32 %v559, 0.0
        %576 = vst [vmem:[%s220] sm:$0xff] %v560
        %577 = vst [vmem:[%s220 + $0x8] sm:$0xff] %v561
        %578 = vst [vmem:[%s220 + $0x10] sm:$0xff] %v562
        %579 = vst [vmem:[%s220 + $0x18] sm:$0xff] %v563
        %580 = vst [vmem:[%s220 + $0x20] sm:$0xff] %v564
        %581 = vst [vmem:[%s220 + $0x28] sm:$0xff] %v565
        %582 = vst [vmem:[%s220 + $0x30] sm:$0xff] %v566
        %583 = vst [vmem:[%s220 + $0x38] sm:$0xff] %v567
        %584 = vst [vmem:[%s220 + $0x40] sm:$0xff] %v568
        %585 = vst [vmem:[%s220 + $0x48] sm:$0xff] %v569
        %586 = vst [vmem:[%s220 + $0x50] sm:$0xff] %v570
        %587 = vst [vmem:[%s220 + $0x58] sm:$0xff] %v571
        %588 = vst [vmem:[%s220 + $0x60] sm:$0xff] %v572
        %589 = vst [vmem:[%s220 + $0x68] sm:$0xff] %v573
        %590 = vst [vmem:[%s220 + $0x70] sm:$0xff] %v574
        %591 = vst [vmem:[%s220 + $0x78] sm:$0xff] %v575
        %s592 = sand.u32 %s98, 1
        %s593 = scalar_lea.sflag [#allocation4], %s592
        %s594 = sand.u32 %s98, 1
        %s595 = smul.addr %s594, 128
        %s596 = scalar_lea.vmem [#allocation7], %s595
        // Predicated region
        $region37: #{tpu_custom_call.1} parent=27 // pred_check
          %p597 = pneg %p108
        $region38: #{tpu_custom_call.1} parent=27 // pred_check_branch
          %599 = sbr.rel (%p597) target = $region40
        $region39: #{tpu_custom_call.1} parent=27 // pred_region
          %s600 = smul.u32 16, %s27
          %s602 = ssub.s32 2048, 2048
          %603 = vsyncadd %s593, %s602
          %s604 = smul.addr %s26, 32
          %s605 = sadd.s32 %s600, %s604
          %s606 = smul.addr %s605, 128
          %s607 = scalar_lea.hbm %s2, %s606
          %s608 = sshll.u32 %s596, 4
          %s609 = int_to_ptr.vmem [resolvable:$true] %s608
          %614 = dma.vmem_to_hbm [thread:$0]  %s609, 2048, %s607, %s593, 128, 128, 8
        $region40: #{tpu_custom_call.1} parent=27 // pred_fallthru
          _
      $region28: #{tpu_custom_call.1} parent=5 // pred_fallthru
        _
      %p615 = scmp.le.s32.totalorder 2, %s17
      // Predicated region
      $region41: #{tpu_custom_call.1} parent=5 // pred_check
        %p616 = pneg %p615
      $region42: #{tpu_custom_call.1} parent=5 // pred_check_branch
        %618 = sbr.rel (%p616) target = $region44
      $region43: #{tpu_custom_call.1} parent=5 // pred_region
        %s619 = ssub.s32 %s17, 2
        // Predicated region
        $region45: #{tpu_custom_call.1} parent=43 // pred_check
          %p620 = pneg %p114
        $region46: #{tpu_custom_call.1} parent=43 // pred_check_branch
          %622 = sbr.rel (%p620) target = $region48
        $region47: #{tpu_custom_call.1} parent=43 // pred_region
          %s623 = sand.u32 %s99, 1
          %s624 = scalar_lea.sflag [#allocation4], %s623
          %s625 = sand.u32 %s99, 1
          %s626 = smul.addr %s625, 128
          %s627 = scalar_lea.vmem [#allocation7], %s626
          %628 = dma.done %s624, 2048
        $region48: #{tpu_custom_call.1} parent=43 // pred_fallthru
          _
      $region44: #{tpu_custom_call.1} parent=5 // pred_fallthru
        _
    $region6: #{tpu_custom_call.1} parent=1 // loop_footer
      %s21 = sadd.s32 1, %s17
    $region7: #{tpu_custom_call.1} parent=1 // loop_footer_branch
      %16 = sbr.rel target = $region3
    $region8: #{tpu_custom_call.1} parent=1 // loop_exit
      _
    %629 = vsyncpa [#allocation3], 1
    %s630 = scalar_lea.sflag [#allocation3], 1
    %631 = vsyncpa %s630, 1
    %632 = vsyncpa [#allocation6], 1
    %s633 = scalar_lea.sflag [#allocation6], 1
    %634 = vsyncpa %s633, 1
    %635 = vsyncpa [#allocation4], 1
    %s636 = scalar_lea.sflag [#allocation4], 1
    %637 = vsyncpa %s636, 1

</llo_original>
